<compile_context>
chip_gen: v6e
topology: v6e:2x2x1
jax: 0.10.0
libtpu: 0.0.40
codegen_flags: <defaults>
</compile_context>

<pallas_src>
import functools

import jax
import jax.numpy as jnp
from jax.experimental import pallas as pl
from jax.experimental.pallas import tpu as pltpu


def _round_up(x: int, m: int) -> int:
    return -(-x // m) * m


def _roi_match_kernel(gt_ref, prop_ref, packed_ref, iou_ref=None, *,
                      iou_thresh: float, num_classes: int, approx_recip: bool):
    gt = gt_ref[...]           # [Gp, 8] f32: x1,y1,x2,y2, combo_bits, 0,0,0
    pr = prop_ref[...]         # [4, TP] f32: x1,y1,x2,y2 (transposed, lane-dense)

    gx1 = gt[:, 0:1]; gy1 = gt[:, 1:2]; gx2 = gt[:, 2:3]; gy2 = gt[:, 3:4]
    combo = pltpu.bitcast(gt[:, 4:5], jnp.int32)      # [Gp,1] (gt_idx<<16 | class)
    area_g = (gx2 - gx1) * (gy2 - gy1)                # [Gp,1] in-kernel (VALU slack)

    px1 = pr[0:1, :]; py1 = pr[1:2, :]; px2 = pr[2:3, :]; py2 = pr[3:4, :]
    area_p = (px2 - px1) * (py2 - py1)                # [1,TP]

    # pairwise IoU (detectron2 pairwise_iou semantics, no +1 on widths)
    iw = jnp.maximum(jnp.minimum(gx2, px2) - jnp.maximum(gx1, px1), 0.0)  # [Gp,TP]
    ih = jnp.maximum(jnp.minimum(gy2, py2) - jnp.maximum(gy1, py1), 0.0)  # [Gp,TP]
    inter = iw * ih
    # +eps: padded-gt x padded-proposal pairs give 0/eps = 0 (no NaN, no where)
    union = jnp.maximum(area_g + area_p - inter, jnp.float32(1e-12))
    if approx_recip:
        iou = inter * pl.reciprocal(union, approx=True)   # EUP slot (VALU freed)
    else:
        iou = inter / union                               # exact matched_vals

    if iou_ref is not None:                 # optional full-matrix writeback
        iou_ref[...] = iou.astype(iou_ref.dtype)

    # --- XLU pass 1: best IoU per proposal (max over gt axis) ---
    mval = jnp.max(iou, axis=0, keepdims=True)                            # [1,TP]

    # --- XLU pass 2: fused argmax (lowest-index tie-break) + class gather ---
    masked = jnp.where(iou == mval, combo, jnp.int32(0x7FFFFFFF))         # [Gp,TP]
    combo_min = jnp.min(masked, axis=0, keepdims=True)                    # [1,TP]
    midx = combo_min >> 16                                                # [1,TP]
    gcls_m = combo_min & 0xFFFF                                           # [1,TP]

    # Matcher labels: IOU_THRESHOLDS=[0.5], IOU_LABELS=[0,1], no low-quality matches
    mlab = (mval >= iou_thresh).astype(jnp.int32)                         # [1,TP]
    gcls = jnp.where(mlab == 0, jnp.int32(num_classes), gcls_m)           # [1,TP]

    # coalesced [4, TP] i32 output slab: one lane-dense store per tile
    mval_bits = pltpu.bitcast(mval, jnp.int32)
    packed_ref[...] = jnp.concatenate([midx, mval_bits, mlab, gcls], axis=0)


def roi_heads_match_batched(gt_boxes, gt_classes, num_gt, proposal_boxes, *,
                            iou_thresh=0.5, num_classes=20, tile_p=None,
                            return_iou=False, iou_dtype=jnp.float32,
                            approx_recip=False):
    """Batched pairwise_iou + Matcher + class assignment (Pallas TPU).

    gt_boxes:       [B, Gmax, 4] f32 (x1,y1,x2,y2), padded; padding ignored via num_gt
    gt_classes:     [B, Gmax]    i32
    num_gt:         [B]          i32 (may contain 0 — that image is all-background)
    proposal_boxes: [B, P, 4]    f32

    Returns: matched_idxs [B,P] i32, matched_vals [B,P] f32,
             matched_labels [B,P] i32, gt_classes_per_prop [B,P] i32.
    With return_iou=True, iou [B, Gmax, P] (padded gt rows give IoU 0) is prepended.
    """
    B, Gmax = int(gt_boxes.shape[0]), int(gt_boxes.shape[1])
    P = int(proposal_boxes.shape[1])
    assert int(proposal_boxes.shape[0]) == B
    assert num_classes < (1 << 16), "num_classes must fit in 16 bits for key packing"

    Gp = max(8, _round_up(max(Gmax, 1), 8))      # pad gt rows to the f32 sublane granule
    assert Gp < (1 << 15), "too many gt boxes for the packed (idx, class) key"

    # tile_p auto: single proposal tile when ~6 live [Gp, tile_p] f32 intermediates
    # fit the 64 x 4KiB vreg file; otherwise split the proposal axis evenly.
    if tile_p is None:
        Pp128 = _round_up(P, 128)
        budget_elems = 6144                      # Gp*tile_p elems (~144 KiB live f32)
        cap = max(128, (budget_elems // Gp) // 128 * 128)
        n_tiles = -(-Pp128 // cap)
        tile_p = _round_up(-(-Pp128 // n_tiles), 128)
    assert tile_p % 128 == 0
    Pp = _round_up(P, tile_p)
    n_tiles = Pp // tile_p

    gt_boxes = gt_boxes.astype(jnp.float32)
    proposal_boxes = proposal_boxes.astype(jnp.float32)
    gt_classes = gt_classes.astype(jnp.int32)
    num_gt = jnp.asarray(num_gt, jnp.int32)

    # ---- gt slab [B, Gp, 8]: boxes + bitcast (idx<<16|class) key; padding rows are
    # zero-area (IoU 0, can never win over real row 0) with background class.
    g_idx = jnp.arange(Gp, dtype=jnp.int32)
    valid = g_idx[None, :] < num_gt[:, None]                              # [B, Gp]
    boxes_pad = jnp.zeros((B, Gp, 4), jnp.float32).at[:, :Gmax].set(gt_boxes)
    boxes_pad = jnp.where(valid[..., None], boxes_pad, 0.0)
    cls_pad = jnp.full((B, Gp), num_classes, jnp.int32).at[:, :Gmax].set(gt_classes)
    cls_pad = jnp.where(valid, cls_pad, jnp.int32(num_classes))
    combo = (g_idx[None, :] << 16) | cls_pad                              # [B, Gp]
    gt_slab = jnp.zeros((B, Gp, 8), jnp.float32)
    gt_slab = gt_slab.at[:, :, 0:4].set(boxes_pad)
    gt_slab = gt_slab.at[:, :, 4].set(jax.lax.bitcast_convert_type(combo, jnp.float32))

    # ---- transposed, lane-dense proposal slab [B, 4, Pp] (areas computed in-kernel);
    # padded proposals are zero boxes -> IoU 0 -> background; trimmed below.
    prop_t = jnp.zeros((B, 4, Pp), jnp.float32)
    prop_t = prop_t.at[:, :, :P].set(jnp.transpose(proposal_boxes, (0, 2, 1)))

    kernel = functools.partial(_roi_match_kernel,
                               iou_thresh=float(iou_thresh),
                               num_classes=int(num_classes),
                               approx_recip=bool(approx_recip))

    out_shapes = [jax.ShapeDtypeStruct((B, 4, Pp), jnp.int32)]            # coalesced
    out_specs = [pl.BlockSpec((None, 4, tile_p), lambda b, i: (b, 0, i))]
    if return_iou:
        out_shapes.append(jax.ShapeDtypeStruct((B, Gp, Pp), iou_dtype))
        out_specs.append(pl.BlockSpec((None, Gp, tile_p), lambda b, i: (b, 0, i)))

    iou_item = jnp.dtype(iou_dtype).itemsize if return_iou else 0
    cost = pl.CostEstimate(
        flops=14 * B * Gp * Pp,
        transcendentals=(B * Gp * Pp) if approx_recip else 0,
        bytes_accessed=(B * n_tiles * Gp * 8 * 4      # gt slab (per-step, conservative)
                        + B * 4 * Pp * 4              # proposal slab in
                        + B * 4 * Pp * 4              # packed slab out
                        + B * Gp * Pp * iou_item))    # optional IoU matrix out

    outs = pl.pallas_call(
        kernel,
        out_shape=tuple(out_shapes),
        grid_spec=pltpu.PrefetchScalarGridSpec(
            num_scalar_prefetch=0,
            grid=(B, n_tiles),
            in_specs=[
                pl.BlockSpec((None, Gp, 8), lambda b, i: (b, 0, 0)),       # gt slab
                pl.BlockSpec((None, 4, tile_p), lambda b, i: (b, 0, i)),   # proposals
            ],
            out_specs=out_specs,
        ),
        compiler_params=pltpu.CompilerParams(
            dimension_semantics=("parallel", "parallel")),
        cost_estimate=cost,
    )(gt_slab, prop_t)

    if return_iou:
        packed, iou_full = outs
    else:
        (packed,) = outs

    midx = packed[:, 0, :P]
    mval = jax.lax.bitcast_convert_type(packed[:, 1, :P], jnp.float32)
    mlab = packed[:, 2, :P]
    gcls = packed[:, 3, :P]
    if return_iou:
        return iou_full[:, :Gmax, :P], midx, mval, mlab, gcls
    return midx, mval, mlab, gcls


def roi_heads_match(gt_boxes, gt_classes, proposal_boxes, **kwargs):
    """Single-image convenience wrapper (G may be 0)."""
    G = int(gt_boxes.shape[0])
    outs = roi_heads_match_batched(gt_boxes[None], gt_classes[None],
                                   jnp.array([G], jnp.int32),
                                   proposal_boxes[None], **kwargs)
    return tuple(o[0] for o in outs)


def _reference(gt_boxes, gt_classes, proposal_boxes, iou_thresh, num_classes):
    """Plain-JAX reference (detectron2 pairwise_iou + Matcher semantics), one image."""
    G = int(gt_boxes.shape[0])
    P = int(proposal_boxes.shape[0])
    if G == 0:
        return (jnp.zeros((0, P), jnp.float32), jnp.zeros((P,), jnp.int32),
                jnp.zeros((P,), jnp.float32), jnp.zeros((P,), jnp.int32),
                jnp.full((P,), num_classes, jnp.int32))
    g = gt_boxes[:, None, :]
    p = proposal_boxes[None, :, :]
    iw = jnp.maximum(jnp.minimum(g[..., 2], p[..., 2]) - jnp.maximum(g[..., 0], p[..., 0]), 0.0)
    ih = jnp.maximum(jnp.minimum(g[..., 3], p[..., 3]) - jnp.maximum(g[..., 1], p[..., 1]), 0.0)
    inter = iw * ih
    area_g = (gt_boxes[:, 2] - gt_boxes[:, 0]) * (gt_boxes[:, 3] - gt_boxes[:, 1])
    area_p = (proposal_boxes[:, 2] - proposal_boxes[:, 0]) * (proposal_boxes[:, 3] - proposal_boxes[:, 1])
    union = area_g[:, None] + area_p[None, :] - inter
    iou = jnp.where(inter > 0.0, inter / union, 0.0)
    mval = jnp.max(iou, axis=0)
    midx = jnp.argmax(iou, axis=0).astype(jnp.int32)
    mlab = (mval >= iou_thresh).astype(jnp.int32)
    gcls = jnp.where(mlab == 0, jnp.int32(num_classes), gt_classes[midx])
    return iou, midx, mval, mlab, gcls


if __name__ == "__main__":
    key = jax.random.PRNGKey(0)
    B, Gmax, P = 3, 7, 1000                 # odd Gmax (sublane padding), realistic P
    NUM_CLASSES, IOU_THRESH = 20, 0.5
    num_gt = jnp.array([5, 0, 7], jnp.int32)  # second image has NO gt (all background)

    kb1, kb2, kp1, kp2, kc = jax.random.split(key, 5)
    gt_ctr = jax.random.uniform(kb1, (B, Gmax, 2), minval=16.0, maxval=112.0)
    gt_wh = jax.random.uniform(kb2, (B, Gmax, 2), minval=8.0, maxval=32.0)
    gt_boxes = jnp.concatenate([gt_ctr - gt_wh / 2, gt_ctr + gt_wh / 2], axis=-1)

    pr_ctr = jax.random.uniform(kp1, (B, P, 2), minval=8.0, maxval=120.0)
    pr_wh = jax.random.uniform(kp2, (B, P, 2), minval=6.0, maxval=40.0)
    proposal_boxes = jnp.concatenate([pr_ctr - pr_wh / 2, pr_ctr + pr_wh / 2], axis=-1)

    gt_classes = jax.random.randint(kc, (B, Gmax), 0, NUM_CLASSES, dtype=jnp.int32)

    # fast path (no [G,P] IoU writeback — the Matcher case), whole batch in one call
    midx_k, mval_k, mlab_k, gcls_k = jax.block_until_ready(
        roi_heads_match_batched(gt_boxes, gt_classes, num_gt, proposal_boxes,
                                iou_thresh=IOU_THRESH, num_classes=NUM_CLASSES))

    # full path (also emits the IoU matrix)
    iou_k, midx_k2, mval_k2, mlab_k2, gcls_k2 = jax.block_until_ready(
        roi_heads_match_batched(gt_boxes, gt_classes, num_gt, proposal_boxes,
                                iou_thresh=IOU_THRESH, num_classes=NUM_CLASSES,
                                return_iou=True))

    for b in range(B):
        ng = int(num_gt[b])
        iou_r, midx_r, mval_r, mlab_r, gcls_r = _reference(
            gt_boxes[b, :ng].astype(jnp.float32), gt_classes[b, :ng],
            proposal_boxes[b].astype(jnp.float32), IOU_THRESH, NUM_CLASSES)
        assert jnp.allclose(iou_k[b, :ng], iou_r, atol=1e-5), "IoU mismatch"
        for midx_x, mval_x, mlab_x, gcls_x in ((midx_k[b], mval_k[b], mlab_k[b], gcls_k[b]),
                                               (midx_k2[b], mval_k2[b], mlab_k2[b], gcls_k2[b])):
            assert jnp.allclose(mval_x, mval_r, atol=1e-5), "matched_vals mismatch"
            assert jnp.array_equal(midx_x, midx_r), "matched_idxs mismatch"
            assert jnp.array_equal(mlab_x, mlab_r), "matched_labels mismatch"
            assert jnp.array_equal(gcls_x, gcls_r), "gt_classes mismatch"

    # single-image wrapper (image 0) matches too
    s_midx, s_mval, s_mlab, s_gcls = jax.block_until_ready(
        roi_heads_match(gt_boxes[0, :5], gt_classes[0, :5], proposal_boxes[0],
                        iou_thresh=IOU_THRESH, num_classes=NUM_CLASSES))
    assert jnp.array_equal(s_midx, midx_k[0]) and jnp.array_equal(s_gcls, gcls_k[0])

    # empty-gt image inside the batch is all background
    assert jnp.array_equal(gcls_k[1], jnp.full((P,), NUM_CLASSES, jnp.int32))
    assert jnp.array_equal(mlab_k[1], jnp.zeros((P,), jnp.int32))

    # opt-in EUP approx-reciprocal path: runs, matched_vals close to exact
    a_midx, a_mval, a_mlab, a_gcls = jax.block_until_ready(
        roi_heads_match_batched(gt_boxes, gt_classes, num_gt, proposal_boxes,
                                iou_thresh=IOU_THRESH, num_classes=NUM_CLASSES,
                                approx_recip=True))
    assert jnp.allclose(a_mval, mval_k, atol=5e-3), "approx matched_vals drifted"

    print("KERNEL_OK")
</pallas_src>

<mosaic_0001>
module attributes {stable_mosaic.version = 11 : i64} {
  func.func @_roi_match_kernel(%arg0: i32, %arg1: i32, %arg2: memref<1x8x8xf32, #tpu.memory_space<vmem>>, %arg3: memref<1x4x512xf32, #tpu.memory_space<vmem>>, %arg4: memref<1x4x512xi32, #tpu.memory_space<vmem>>) attributes {dimension_semantics = [#tpu.dimension_semantics<parallel>, #tpu.dimension_semantics<parallel>], iteration_bounds = array<i64: 3, 2>, scalar_prefetch = 0 : i64, scratch_operands = 0 : i64, tpu.core_type = #tpu.core_type<tc>, window_params = [{transform_indices = @transform_0, window_bounds = array<i64: 1, 8, 8>}, {transform_indices = @transform_1, window_bounds = array<i64: 1, 4, 512>}, {transform_indices = @transform_2, window_bounds = array<i64: 1, 4, 512>}]} {
    %c0 = arith.constant 0 : index
    %c0_0 = arith.constant 0 : index
    %c0_1 = arith.constant 0 : index
    %0 = vector.load %arg2[%c0, %c0_0, %c0_1] : memref<1x8x8xf32, #tpu.memory_space<vmem>>, vector<1x8x8xf32>
    %1 = vector.shape_cast %0 : vector<1x8x8xf32> to vector<8x8xf32>
    %c0_2 = arith.constant 0 : index
    %c0_3 = arith.constant 0 : index
    %c0_4 = arith.constant 0 : index
    %2 = vector.load %arg3[%c0_2, %c0_3, %c0_4] : memref<1x4x512xf32, #tpu.memory_space<vmem>>, vector<1x4x512xf32>
    %3 = vector.shape_cast %2 : vector<1x4x512xf32> to vector<4x512xf32>
    %4 = vector.extract_strided_slice %1 {offsets = [0, 0], sizes = [8, 1], strides = [1, 1]} : vector<8x8xf32> to vector<8x1xf32>
    %5 = vector.extract_strided_slice %1 {offsets = [0, 1], sizes = [8, 1], strides = [1, 1]} : vector<8x8xf32> to vector<8x1xf32>
    %6 = vector.extract_strided_slice %1 {offsets = [0, 2], sizes = [8, 1], strides = [1, 1]} : vector<8x8xf32> to vector<8x1xf32>
    %7 = vector.extract_strided_slice %1 {offsets = [0, 3], sizes = [8, 1], strides = [1, 1]} : vector<8x8xf32> to vector<8x1xf32>
    %8 = vector.extract_strided_slice %1 {offsets = [0, 4], sizes = [8, 1], strides = [1, 1]} : vector<8x8xf32> to vector<8x1xf32>
    %9 = tpu.bitcast %8 : vector<8x1xf32> -> vector<8x1xi32>
    %10 = arith.subf %6, %4 : vector<8x1xf32>
    %11 = arith.subf %7, %5 : vector<8x1xf32>
    %12 = arith.mulf %10, %11 : vector<8x1xf32>
    %13 = vector.extract_strided_slice %3 {offsets = [0, 0], sizes = [1, 512], strides = [1, 1]} : vector<4x512xf32> to vector<1x512xf32>
    %14 = vector.extract_strided_slice %3 {offsets = [1, 0], sizes = [1, 512], strides = [1, 1]} : vector<4x512xf32> to vector<1x512xf32>
    %15 = vector.extract_strided_slice %3 {offsets = [2, 0], sizes = [1, 512], strides = [1, 1]} : vector<4x512xf32> to vector<1x512xf32>
    %16 = vector.extract_strided_slice %3 {offsets = [3, 0], sizes = [1, 512], strides = [1, 1]} : vector<4x512xf32> to vector<1x512xf32>
    %17 = arith.subf %15, %13 : vector<1x512xf32>
    %18 = arith.subf %16, %14 : vector<1x512xf32>
    %19 = arith.mulf %17, %18 : vector<1x512xf32>
    %20 = vector.broadcast %6 : vector<8x1xf32> to vector<8x512xf32>
    %21 = vector.broadcast %15 : vector<1x512xf32> to vector<8x512xf32>
    %22 = arith.minimumf %20, %21 : vector<8x512xf32>
    %23 = vector.broadcast %4 : vector<8x1xf32> to vector<8x512xf32>
    %24 = vector.broadcast %13 : vector<1x512xf32> to vector<8x512xf32>
    %25 = arith.maximumf %23, %24 : vector<8x512xf32>
    %26 = arith.subf %22, %25 : vector<8x512xf32>
    %cst = arith.constant 0.000000e+00 : f32
    %27 = vector.broadcast %cst : f32 to vector<8x512xf32>
    %28 = arith.maximumf %26, %27 : vector<8x512xf32>
    %29 = vector.broadcast %7 : vector<8x1xf32> to vector<8x512xf32>
    %30 = vector.broadcast %16 : vector<1x512xf32> to vector<8x512xf32>
    %31 = arith.minimumf %29, %30 : vector<8x512xf32>
    %32 = vector.broadcast %5 : vector<8x1xf32> to vector<8x512xf32>
    %33 = vector.broadcast %14 : vector<1x512xf32> to vector<8x512xf32>
    %34 = arith.maximumf %32, %33 : vector<8x512xf32>
    %35 = arith.subf %31, %34 : vector<8x512xf32>
    %cst_5 = arith.constant 0.000000e+00 : f32
    %36 = vector.broadcast %cst_5 : f32 to vector<8x512xf32>
    %37 = arith.maximumf %35, %36 : vector<8x512xf32>
    %38 = arith.mulf %28, %37 : vector<8x512xf32>
    %39 = vector.broadcast %12 : vector<8x1xf32> to vector<8x512xf32>
    %40 = vector.broadcast %19 : vector<1x512xf32> to vector<8x512xf32>
    %41 = arith.addf %39, %40 : vector<8x512xf32>
    %42 = arith.subf %41, %38 : vector<8x512xf32>
    %cst_6 = arith.constant 9.99999996E-13 : f32
    %43 = vector.broadcast %cst_6 : f32 to vector<8x512xf32>
    %44 = arith.maximumf %42, %43 : vector<8x512xf32>
    %45 = arith.divf %38, %44 : vector<8x512xf32>
    %cst_7 = arith.constant dense<0xFF800000> : vector<512xf32>
    %46 = vector.multi_reduction <maximumf>, %45, %cst_7 [0] : vector<8x512xf32> to vector<512xf32>
    %47 = vector.shape_cast %46 : vector<512xf32> to vector<1x512xf32>
    %48 = vector.broadcast %47 : vector<1x512xf32> to vector<8x512xf32>
    %49 = arith.cmpf oeq, %45, %48 : vector<8x512xf32>
    %c2147483647_i32 = arith.constant 2147483647 : i32
    %50 = vector.shape_cast %9 : vector<8x1xi32> to vector<8x1xi32>
    %51 = vector.broadcast %50 : vector<8x1xi32> to vector<8x512xi32>
    %52 = vector.broadcast %c2147483647_i32 : i32 to vector<8x512xi32>
    %53 = arith.select %49, %51, %52 : vector<8x512xi1>, vector<8x512xi32>
    %cst_8 = arith.constant dense<2147483647> : vector<512xi32>
    %54 = vector.multi_reduction <minsi>, %53, %cst_8 [0] : vector<8x512xi32> to vector<512xi32>
    %55 = vector.shape_cast %54 : vector<512xi32> to vector<1x512xi32>
    %c16_i32 = arith.constant 16 : i32
    %56 = vector.broadcast %c16_i32 : i32 to vector<1x512xi32>
    %57 = arith.shrsi %55, %56 : vector<1x512xi32>
    %c65535_i32 = arith.constant 65535 : i32
    %58 = vector.broadcast %c65535_i32 : i32 to vector<1x512xi32>
    %59 = arith.andi %55, %58 : vector<1x512xi32>
    %cst_9 = arith.constant 5.000000e-01 : f32
    %60 = vector.broadcast %cst_9 : f32 to vector<1x512xf32>
    %61 = arith.cmpf oge, %47, %60 : vector<1x512xf32>
    %62 = arith.extui %61 : vector<1x512xi1> to vector<1x512xi32>
    %c0_i32 = arith.constant 0 : i32
    %63 = vector.broadcast %c0_i32 : i32 to vector<1x512xi32>
    %64 = arith.cmpi eq, %62, %63 : vector<1x512xi32>
    %c20_i32 = arith.constant 20 : i32
    %65 = vector.broadcast %c20_i32 : i32 to vector<1x512xi32>
    %66 = arith.select %64, %65, %59 : vector<1x512xi1>, vector<1x512xi32>
    %67 = tpu.bitcast %47 : vector<1x512xf32> -> vector<1x512xi32>
    %68 = tpu.concatenate %57, %67, %62, %66 in 0 : vector<1x512xi32>, vector<1x512xi32>, vector<1x512xi32>, vector<1x512xi32> -> vector<4x512xi32>
    %c0_10 = arith.constant 0 : index
    %c0_11 = arith.constant 0 : index
    %c0_12 = arith.constant 0 : index
    %69 = vector.load %arg4[%c0_10, %c0_11, %c0_12] : memref<1x4x512xi32, #tpu.memory_space<vmem>>, vector<1x4x512xi32>
    %70 = vector.shape_cast %69 : vector<1x4x512xi32> to vector<4x512xi32>
    %71 = vector.shape_cast %68 : vector<4x512xi32> to vector<1x4x512xi32>
    tpu.vector_store %arg4[%c0_10, %c0_11, %c0_12], %71 {strides = array<i32>} : memref<1x4x512xi32, #tpu.memory_space<vmem>>, vector<1x4x512xi32>,
    return
  }
  func.func @transform_0(%arg0: i32, %arg1: i32) -> (i32, i32, i32) {
    %c0_i32 = arith.constant 0 : i32
    %c0_i32_0 = arith.constant 0 : i32
    %c0_i32_1 = arith.constant 0 : i32
    return %arg0, %c0_i32, %c0_i32_0 : i32, i32, i32
  }
  func.func @transform_1(%arg0: i32, %arg1: i32) -> (i32, i32, i32) {
    %c0_i32 = arith.constant 0 : i32
    %c0_i32_0 = arith.constant 0 : i32
    return %arg0, %c0_i32, %arg1 : i32, i32, i32
  }
  func.func @transform_2(%arg0: i32, %arg1: i32) -> (i32, i32, i32) {
    %c0_i32 = arith.constant 0 : i32
    %c0_i32_0 = arith.constant 0 : i32
    return %arg0, %c0_i32, %arg1 : i32, i32, i32
  }
}

</mosaic_0001>

<llo_original>
// kernel: tpu_custom_call.1
$region0: #{tpu_custom_call.1}
  #allocation0 [shape = 'u32[]', space=smem, size = 0x4, offset = 0x4, fixed_abs, tag = 'smem constant byte address 0x4 - core index']
  #allocation1 [shape = 'u32[144,128]{1,0:T(1,128)}', space=vmem, size = 0x12000, scoped, tag = 'internal scratch']
  %s0 = inlined_call_operand.hbm [shape: f32[3,8,8], index: 0, kind: input, shape index: {}]
  %s1 = inlined_call_operand.hbm [shape: f32[3,4,1024], index: 1, kind: input, shape index: {}]
  %s2 = inlined_call_operand.hbm [shape: s32[3,4,1024], index: 2, kind: output, shape index: {}]
  %s3 = sld [smem:[#allocation0]]
  $region49: #{tpu_custom_call.1} parent=0
    _
  %s5 = ssub.s32 1, %s3
  %s6 = scalar_select 0, %s5, %s3
  $region1: #{tpu_custom_call.1} parent=0
    #allocation2 [shape = 'u8[8192]{0}', space=vmem, size = 0x2000, scoped, tag = 'input window, operand 0']
    #allocation3 [shape = 's32[2]{0}', space=sflag, size = 0x8, scoped, tag = 'scoped memory for tpu_custom_call.1']
    #allocation4 [shape = 's32[2]{0}', space=sflag, size = 0x8, scoped, tag = 'scoped memory for tpu_custom_call.1']
    #allocation5 [shape = 'u8[16384]{0}', space=vmem, size = 0x4000, scoped, tag = 'input window, operand 1']
    #allocation6 [shape = 's32[2]{0}', space=sflag, size = 0x8, scoped, tag = 'scoped memory for tpu_custom_call.1']
    #allocation7 [shape = 'u8[16384]{0}', space=vmem, size = 0x4000, scoped, tag = 'output window, operand 0']
    %7 = vsyncpa [#allocation3], 0
    %s8 = scalar_lea.sflag [#allocation3], 1
    %9 = vsyncpa %s8, 0
    %10 = vsyncpa [#allocation6], 0
    %s11 = scalar_lea.sflag [#allocation6], 1
    %12 = vsyncpa %s11, 0
    %13 = vsyncpa [#allocation4], 0
    %s14 = scalar_lea.sflag [#allocation4], 1
    %15 = vsyncpa %s14, 0
    loop: start=0, step=1, limit=8
    $region2: #{tpu_custom_call.1} parent=1 // loop_pre_header
      _
    $region3: #{tpu_custom_call.1} parent=1 // loop_header
      %s17 = sphi 0, %s21
      %p18 = scmp.ge.s32.totalorder %s17, 8
      %s24 = sphi 0, %s36
      %s25 = sphi 0, %s32
      %s26 = sphi 0, %s24
      %s27 = sphi 0, %s25
      %s28 = sphi 0, %s26
      %s29 = sphi 0, %s27
      %s39 = sphi 0, %s41
      %s42 = sphi 0, %s39
      %s43 = sphi 0, %s42
      %s59 = sphi 0, %s43
      %s67 = sphi 0, %s69
      %s70 = sphi 0, %s67
      %s71 = sphi 0, %s70
      %s87 = sphi 0, %s71
      %s95 = sphi 0, %s97
      %s98 = sphi 0, %s95
      %s99 = sphi 0, %s98
      %s115 = sphi 0, %s99
    $region4: #{tpu_custom_call.1} parent=1 // loop_header_branch
      %20 = sbr.rel (%p18) target = $region8
    $region5: #{tpu_custom_call.1} parent=1 // loop_body
      %s22 = ssub.s32 %s17, 1
      %s23 = ssub.s32 %s17, 2
      %s30 = sadd.s32 1, %s25
      %p31 = scmp.ge.s32.totalorder %s30, 2
      %s32 = scalar_select %p31, 0, %s30
      %s33 = sadd.s32 1, %s24
      %s34 = scalar_select %p31, %s33, %s24
      %p35 = scmp.ge.s32.totalorder %s34, 3
      %s36 = scalar_select %p35, 0, %s34
      %s37 = ssub.s32 %s24, %s36
      %p38 = scmp.eq.s32.totalorder %s37, 0
      %s40 = sadd.s32 %s39, 1
      %s41 = scalar_select %p38, %s39, %s40
      %p44 = pneg %p38
      %p45 = scmp.eq.s32.totalorder %s17, 5
      %p46 = por %p44, %p45
      %p47 = scmp.ne.s32.totalorder %s39, %s42
      %p48 = scmp.eq.s32.totalorder %s17, 0
      %p49 = por %p47, %p48
      %p50 = scmp.ne.s32.totalorder %s39, %s42
      %p51 = scmp.eq.s32.totalorder %s22, 5
      %p52 = por %p50, %p51
      %p53 = scmp.ne.s32.totalorder %s42, %s43
      %p54 = scmp.eq.s32.totalorder %s22, 0
      %p55 = por %p53, %p54
      %p56 = scmp.ne.s32.totalorder %s42, %s43
      %p57 = scmp.eq.s32.totalorder %s23, 5
      %p58 = por %p56, %p57
      %p60 = scmp.ne.s32.totalorder %s43, %s59
      %p61 = scmp.eq.s32.totalorder %s23, 0
      %p62 = por %p60, %p61
      %s63 = ssub.s32 %s24, %s36
      %s64 = ssub.s32 %s25, %s32
      %s65 = sor.u32 %s63, %s64
      %p66 = scmp.eq.s32.totalorder %s65, 0
      %s68 = sadd.s32 %s67, 1
      %s69 = scalar_select %p66, %s67, %s68
      %p72 = pneg %p66
      %p73 = scmp.eq.s32.totalorder %s17, 5
      %p74 = por %p72, %p73
      %p75 = scmp.ne.s32.totalorder %s67, %s70
      %p76 = scmp.eq.s32.totalorder %s17, 0
      %p77 = por %p75, %p76
      %p78 = scmp.ne.s32.totalorder %s67, %s70
      %p79 = scmp.eq.s32.totalorder %s22, 5
      %p80 = por %p78, %p79
      %p81 = scmp.ne.s32.totalorder %s70, %s71
      %p82 = scmp.eq.s32.totalorder %s22, 0
      %p83 = por %p81, %p82
      %p84 = scmp.ne.s32.totalorder %s70, %s71
      %p85 = scmp.eq.s32.totalorder %s23, 5
      %p86 = por %p84, %p85
      %p88 = scmp.ne.s32.totalorder %s71, %s87
      %p89 = scmp.eq.s32.totalorder %s23, 0
      %p90 = por %p88, %p89
      %s91 = ssub.s32 %s24, %s36
      %s92 = ssub.s32 %s25, %s32
      %s93 = sor.u32 %s91, %s92
      %p94 = scmp.eq.s32.totalorder %s93, 0
      %s96 = sadd.s32 %s95, 1
      %s97 = scalar_select %p94, %s95, %s96
      %p100 = pneg %p94
      %p101 = scmp.eq.s32.totalorder %s17, 5
      %p102 = por %p100, %p101
      %p103 = scmp.ne.s32.totalorder %s95, %s98
      %p104 = scmp.eq.s32.totalorder %s17, 0
      %p105 = por %p103, %p104
      %p106 = scmp.ne.s32.totalorder %s95, %s98
      %p107 = scmp.eq.s32.totalorder %s22, 5
      %p108 = por %p106, %p107
      %p109 = scmp.ne.s32.totalorder %s98, %s99
      %p110 = scmp.eq.s32.totalorder %s22, 0
      %p111 = por %p109, %p110
      %p112 = scmp.ne.s32.totalorder %s98, %s99
      %p113 = scmp.eq.s32.totalorder %s23, 5
      %p114 = por %p112, %p113
      %p116 = scmp.ne.s32.totalorder %s99, %s115
      %p117 = scmp.eq.s32.totalorder %s23, 0
      %p118 = por %p116, %p117
      %p119 = scmp.le.s32.totalorder 1, %s17
      %p120 = scmp.lt.s32.totalorder %s17, 7
      %p121 = pnand %p119, %p120
      %p122 = pneg %p121
      // Predicated region
      $region9: #{tpu_custom_call.1} parent=5 // pred_check
        _
      $region10: #{tpu_custom_call.1} parent=5 // pred_check_branch
        %124 = sbr.rel (%p121) target = $region12
      $region11: #{tpu_custom_call.1} parent=5 // pred_region
        %s125 = ssub.s32 %s17, 1
      $region12: #{tpu_custom_call.1} parent=5 // pred_fallthru
        _
      %p126 = scmp.lt.s32.totalorder %s17, 6
      // Predicated region
      $region13: #{tpu_custom_call.1} parent=5 // pred_check
        %p127 = pneg %p126
      $region14: #{tpu_custom_call.1} parent=5 // pred_check_branch
        %129 = sbr.rel (%p127) target = $region16
      $region15: #{tpu_custom_call.1} parent=5 // pred_region
        // Predicated region
        $region17: #{tpu_custom_call.1} parent=15 // pred_check
          %p130 = pneg %p49
        $region18: #{tpu_custom_call.1} parent=15 // pred_check_branch
          %132 = sbr.rel (%p130) target = $region20
        $region19: #{tpu_custom_call.1} parent=15 // pred_region
          %s133 = sand.u32 %s39, 1
          %s134 = scalar_lea.sflag [#allocation3], %s133
          %s135 = sand.u32 %s39, 1
          %s136 = smul.addr %s135, 8
          %s137 = scalar_lea.vmem [#allocation2], %s136
          %s139 = ssub.s32 128, 128
          %140 = vsyncadd %s134, %s139
          %s141 = smul.addr %s24, 128
          %s142 = scalar_lea.hbm %s0, %s141
          %s144 = sshll.u32 %s137, 4
          %s145 = int_to_ptr.vmem [resolvable:$true] %s144
          %147 = dma.hbm_to_vmem [thread:$0]  %s142, 128, %s145, %s134
        $region20: #{tpu_custom_call.1} parent=15 // pred_fallthru
          _
        // Predicated region
        $region21: #{tpu_custom_call.1} parent=15 // pred_check
          %p148 = pneg %p77
        $region22: #{tpu_custom_call.1} parent=15 // pred_check_branch
          %150 = sbr.rel (%p148) target = $region24
        $region23: #{tpu_custom_call.1} parent=15 // pred_region
          %s151 = sand.u32 %s67, 1
          %s152 = scalar_lea.sflag [#allocation6], %s151
          %s153 = sand.u32 %s67, 1
          %s154 = smul.addr %s153, 16
          %s155 = scalar_lea.vmem [#allocation5], %s154
          %s156 = smul.u32 4, %s25
          %s158 = ssub.s32 256, 256
          %159 = vsyncadd %s152, %s158
          %s160 = smul.addr %s24, 8
          %s161 = sadd.s32 %s156, %s160
          %s162 = smul.addr %s161, 64
          %s163 = scalar_lea.hbm %s1, %s162
          %s165 = sshll.u32 %s155, 4
          %s166 = int_to_ptr.vmem [resolvable:$true] %s165
          %168 = dma.hbm_to_vmem [thread:$0]  %s163, 256, %s166, %s152
        $region24: #{tpu_custom_call.1} parent=15 // pred_fallthru
          _
      $region16: #{tpu_custom_call.1} parent=5 // pred_fallthru
        _
      %p169 = scmp.le.s32.totalorder 1, %s17
      %p170 = scmp.lt.s32.totalorder %s17, 7
      %p171 = pnand %p169, %p170
      %p172 = pneg %p171
      // Predicated region
      $region25: #{tpu_custom_call.1} parent=5 // pred_check
        _
      $region26: #{tpu_custom_call.1} parent=5 // pred_check_branch
        %174 = sbr.rel (%p171) target = $region28
      $region27: #{tpu_custom_call.1} parent=5 // pred_region
        %s175 = ssub.s32 %s17, 1
        %s176 = sand.u32 %s42, 1
        %s177 = scalar_lea.sflag [#allocation3], %s176
        %s178 = sand.u32 %s42, 1
        %s179 = smul.addr %s178, 8
        %s180 = scalar_lea.vmem [#allocation2], %s179
        // Predicated region
        $region29: #{tpu_custom_call.1} parent=27 // pred_check
          %p181 = pneg %p55
        $region30: #{tpu_custom_call.1} parent=27 // pred_check_branch
          %183 = sbr.rel (%p181) target = $region32
        $region31: #{tpu_custom_call.1} parent=27 // pred_region
          %184 = dma.done %s177, 128
        $region32: #{tpu_custom_call.1} parent=27 // pred_fallthru
          _
        %s185 = sand.u32 %s70, 1
        %s186 = scalar_lea.sflag [#allocation6], %s185
        %s187 = sand.u32 %s70, 1
        %s188 = smul.addr %s187, 16
        %s189 = scalar_lea.vmem [#allocation5], %s188
        // Predicated region
        $region33: #{tpu_custom_call.1} parent=27 // pred_check
          %p190 = pneg %p83
        $region34: #{tpu_custom_call.1} parent=27 // pred_check_branch
          %192 = sbr.rel (%p190) target = $region36
        $region35: #{tpu_custom_call.1} parent=27 // pred_region
          %193 = dma.done %s186, 256
        $region36: #{tpu_custom_call.1} parent=27 // pred_fallthru
          _
        %s194 = sand.u32 %s42, 1
        %s195 = scalar_lea.sflag [#allocation3], %s194
        %s196 = sand.u32 %s42, 1
        %s197 = smul.addr %s196, 8
        %s198 = scalar_lea.vmem [#allocation2], %s197
        %p199 = pneg %p55
        %p200 = pneg %p52
        %s201 = sand.u32 %s70, 1
        %s202 = scalar_lea.sflag [#allocation6], %s201
        %s203 = sand.u32 %s70, 1
        %s204 = smul.addr %s203, 16
        %s205 = scalar_lea.vmem [#allocation5], %s204
        %p206 = pneg %p83
        %p207 = pneg %p80
        %p208 = pneg %p111
        %p209 = pneg %p108
        %s210 = sand.u32 %s98, 1
        %s211 = scalar_lea.sflag [#allocation4], %s210
        %s212 = sand.u32 %s98, 1
        %s213 = smul.addr %s212, 16
        %s214 = scalar_lea.vmem [#allocation7], %s213
        %s215 = smul.u32 4, %s27
        %s216 = smul.u32 4, %s27
        %v217 = vld [vmem:[%s180] sm:$0xff]
        %v218 = vld [vmem:[%s189] sm:$0xff]
        %v219 = vld [vmem:[%s189 + $0x8] sm:$0xff]
        %221 = vrot.lane.b32.xlu0 %v217, 2
        %v222 = vpop.permute.xlu0 %221
        %v224 = vsub.f32 %v217, %v222
        %226 = vrot.lane.b32.xlu0 %v224, 127
        %v227 = vpop.permute.xlu0 %226
        %v229 = vmul.f32 %v224, %v227
        %v232 = vrot.slane %v218, 6
        %v233 = vrot.slane %v219, 6
        %v236 = vsub.f32 %v218, %v232
        %v237 = vsub.f32 %v219, %v233
        %v240 = vrot.slane %v236, 5
        %v241 = vrot.slane %v240, 4
        %v242 = vrot.slane %v237, 5
        %v243 = vrot.slane %v242, 4
        %v246 = vmul.f32 %v236, %v241
        %v247 = vmul.f32 %v237, %v243
        %248 = vset.pattern.permute.xlu0 2
        %249 = vperm.xlu0 %248, %v217
        %v250 = vpop.permute.xlu0 %249
        %v252 = vlaneseq
        %v253 = vshrl.u32 %v252, 7
        %v254 = vsub.s32 2, %v253
        %v255 = vrot.slane %v218, %v254
        %v256 = vlaneseq
        %v257 = vshrl.u32 %v256, 7
        %v258 = vsub.s32 6, %v257
        %v259 = vrot.slane %v218, %v258
        %v260 = vlaneseq
        %v261 = vshrl.u32 %v260, 7
        %v262 = vsub.s32 2, %v261
        %v263 = vrot.slane %v219, %v262
        %v264 = vlaneseq
        %v265 = vshrl.u32 %v264, 7
        %v266 = vsub.s32 6, %v265
        %v267 = vrot.slane %v219, %v266
        %v272 = vlaneseq
        %v273 = vshrl.u32 %v272, 7
        %v274 = vsub.s32 2, %v273
        %v275 = vrot.slane %v255, %v274
        %v276 = vlaneseq
        %v277 = vshrl.u32 %v276, 7
        %v278 = vsub.s32 2, %v277
        %v279 = vrot.slane %v259, %v278
        %v280 = vlaneseq
        %v281 = vshrl.u32 %v280, 7
        %v282 = vsub.s32 2, %v281
        %v283 = vrot.slane %v263, %v282
        %v284 = vlaneseq
        %v285 = vshrl.u32 %v284, 7
        %v286 = vsub.s32 2, %v285
        %v287 = vrot.slane %v267, %v286
        %v288 = vmin.f32 %v250, %v275
        %v289 = vmin.f32 %v250, %v279
        %v290 = vmin.f32 %v250, %v283
        %v291 = vmin.f32 %v250, %v287
        %292 = vset.pattern.permute.xlu0 0
        %293 = vperm.xlu0 %292, %v217
        %v294 = vpop.permute.xlu0 %293
        %v296 = vlaneseq
        %v297 = vshrl.u32 %v296, 7
        %v298 = vsub.s32 0, %v297
        %v299 = vrot.slane %v218, %v298
        %v300 = vlaneseq
        %v301 = vshrl.u32 %v300, 7
        %v302 = vsub.s32 4, %v301
        %v303 = vrot.slane %v218, %v302
        %v304 = vlaneseq
        %v305 = vshrl.u32 %v304, 7
        %v306 = vsub.s32 0, %v305
        %v307 = vrot.slane %v219, %v306
        %v308 = vlaneseq
        %v309 = vshrl.u32 %v308, 7
        %v310 = vsub.s32 4, %v309
        %v311 = vrot.slane %v219, %v310
        %v316 = vlaneseq
        %v317 = vshrl.u32 %v316, 7
        %v318 = vsub.s32 0, %v317
        %v319 = vrot.slane %v299, %v318
        %v320 = vlaneseq
        %v321 = vshrl.u32 %v320, 7
        %v322 = vsub.s32 0, %v321
        %v323 = vrot.slane %v303, %v322
        %v324 = vlaneseq
        %v325 = vshrl.u32 %v324, 7
        %v326 = vsub.s32 0, %v325
        %v327 = vrot.slane %v307, %v326
        %v328 = vlaneseq
        %v329 = vshrl.u32 %v328, 7
        %v330 = vsub.s32 0, %v329
        %v331 = vrot.slane %v311, %v330
        %v332 = vmax.f32 %v294, %v319
        %v333 = vmax.f32 %v294, %v323
        %v334 = vmax.f32 %v294, %v327
        %v335 = vmax.f32 %v294, %v331
        %v336 = vsub.f32 %v288, %v332
        %v337 = vsub.f32 %v289, %v333
        %v338 = vsub.f32 %v290, %v334
        %v339 = vsub.f32 %v291, %v335
        %v340 = vmax.f32 %v336, 0.0
        %v341 = vmax.f32 %v337, 0.0
        %v342 = vmax.f32 %v338, 0.0
        %v343 = vmax.f32 %v339, 0.0
        %344 = vset.pattern.permute.xlu0 3
        %345 = vperm.xlu0 %344, %v217
        %v346 = vpop.permute.xlu0 %345
        %v348 = vlaneseq
        %v349 = vshrl.u32 %v348, 7
        %v350 = vsub.s32 3, %v349
        %v351 = vrot.slane %v218, %v350
        %v352 = vlaneseq
        %v353 = vshrl.u32 %v352, 7
        %v354 = vsub.s32 7, %v353
        %v355 = vrot.slane %v218, %v354
        %v356 = vlaneseq
        %v357 = vshrl.u32 %v356, 7
        %v358 = vsub.s32 3, %v357
        %v359 = vrot.slane %v219, %v358
        %v360 = vlaneseq
        %v361 = vshrl.u32 %v360, 7
        %v362 = vsub.s32 7, %v361
        %v363 = vrot.slane %v219, %v362
        %v368 = vlaneseq
        %v369 = vshrl.u32 %v368, 7
        %v370 = vsub.s32 3, %v369
        %v371 = vrot.slane %v351, %v370
        %v372 = vlaneseq
        %v373 = vshrl.u32 %v372, 7
        %v374 = vsub.s32 3, %v373
        %v375 = vrot.slane %v355, %v374
        %v376 = vlaneseq
        %v377 = vshrl.u32 %v376, 7
        %v378 = vsub.s32 3, %v377
        %v379 = vrot.slane %v359, %v378
        %v380 = vlaneseq
        %v381 = vshrl.u32 %v380, 7
        %v382 = vsub.s32 3, %v381
        %v383 = vrot.slane %v363, %v382
        %v384 = vmin.f32 %v346, %v371
        %v385 = vmin.f32 %v346, %v375
        %v386 = vmin.f32 %v346, %v379
        %v387 = vmin.f32 %v346, %v383
        %388 = vset.pattern.permute.xlu0 1
        %389 = vperm.xlu0 %388, %v217
        %v390 = vpop.permute.xlu0 %389
        %v392 = vlaneseq
        %v393 = vshrl.u32 %v392, 7
        %v394 = vsub.s32 1, %v393
        %v395 = vrot.slane %v218, %v394
        %v396 = vlaneseq
        %v397 = vshrl.u32 %v396, 7
        %v398 = vsub.s32 5, %v397
        %v399 = vrot.slane %v218, %v398
        %v400 = vlaneseq
        %v401 = vshrl.u32 %v400, 7
        %v402 = vsub.s32 1, %v401
        %v403 = vrot.slane %v219, %v402
        %v404 = vlaneseq
        %v405 = vshrl.u32 %v404, 7
        %v406 = vsub.s32 5, %v405
        %v407 = vrot.slane %v219, %v406
        %v412 = vlaneseq
        %v413 = vshrl.u32 %v412, 7
        %v414 = vsub.s32 1, %v413
        %v415 = vrot.slane %v395, %v414
        %v416 = vlaneseq
        %v417 = vshrl.u32 %v416, 7
        %v418 = vsub.s32 1, %v417
        %v419 = vrot.slane %v399, %v418
        %v420 = vlaneseq
        %v421 = vshrl.u32 %v420, 7
        %v422 = vsub.s32 1, %v421
        %v423 = vrot.slane %v403, %v422
        %v424 = vlaneseq
        %v425 = vshrl.u32 %v424, 7
        %v426 = vsub.s32 1, %v425
        %v427 = vrot.slane %v407, %v426
        %v428 = vmax.f32 %v390, %v415
        %v429 = vmax.f32 %v390, %v419
        %v430 = vmax.f32 %v390, %v423
        %v431 = vmax.f32 %v390, %v427
        %v432 = vsub.f32 %v384, %v428
        %v433 = vsub.f32 %v385, %v429
        %v434 = vsub.f32 %v386, %v430
        %v435 = vsub.f32 %v387, %v431
        %v436 = vmax.f32 %v432, 0.0
        %v437 = vmax.f32 %v433, 0.0
        %v438 = vmax.f32 %v434, 0.0
        %v439 = vmax.f32 %v435, 0.0
        %v440 = vmul.f32 %v340, %v436
        %v441 = vmul.f32 %v341, %v437
        %v442 = vmul.f32 %v342, %v438
        %v443 = vmul.f32 %v343, %v439
        %445 = vset.pattern.permute.xlu0 2
        %446 = vperm.xlu0 %445, %v229
        %v447 = vpop.permute.xlu0 %446
        %v451 = vlaneseq
        %v452 = vshrl.u32 %v451, 7
        %v453 = vsub.s32 2, %v452
        %v454 = vrot.slane %v246, %v453
        %v455 = vlaneseq
        %v456 = vshrl.u32 %v455, 7
        %v457 = vsub.s32 6, %v456
        %v458 = vrot.slane %v246, %v457
        %v459 = vlaneseq
        %v460 = vshrl.u32 %v459, 7
        %v461 = vsub.s32 2, %v460
        %v462 = vrot.slane %v247, %v461
        %v463 = vlaneseq
        %v464 = vshrl.u32 %v463, 7
        %v465 = vsub.s32 6, %v464
        %v466 = vrot.slane %v247, %v465
        %v471 = vlaneseq
        %v472 = vshrl.u32 %v471, 7
        %v473 = vsub.s32 2, %v472
        %v474 = vrot.slane %v454, %v473
        %v475 = vlaneseq
        %v476 = vshrl.u32 %v475, 7
        %v477 = vsub.s32 2, %v476
        %v478 = vrot.slane %v458, %v477
        %v479 = vlaneseq
        %v480 = vshrl.u32 %v479, 7
        %v481 = vsub.s32 2, %v480
        %v482 = vrot.slane %v462, %v481
        %v483 = vlaneseq
        %v484 = vshrl.u32 %v483, 7
        %v485 = vsub.s32 2, %v484
        %v486 = vrot.slane %v466, %v485
        %v487 = vadd.f32 %v447, %v474
        %v488 = vadd.f32 %v447, %v478
        %v489 = vadd.f32 %v447, %v482
        %v490 = vadd.f32 %v447, %v486
        %v491 = vsub.f32 %v487, %v440
        %v492 = vsub.f32 %v488, %v441
        %v493 = vsub.f32 %v489, %v442
        %v494 = vsub.f32 %v490, %v443
        %v495 = vmax.f32 %v491, 1e-12
        %v496 = vmax.f32 %v492, 1e-12
        %v497 = vmax.f32 %v493, 1e-12
        %v498 = vmax.f32 %v494, 1e-12
        %v499 = vrcp.pop %v495
        %v500 = vmul.f32 %v440, %v499
        %v501 = vrcp.pop %v496
        %v502 = vmul.f32 %v441, %v501
        %v503 = vrcp.pop %v497
        %v504 = vmul.f32 %v442, %v503
        %v505 = vrcp.pop %v498
        %v506 = vmul.f32 %v443, %v505
        %v507 = vrot.slane %v500, 4
        %v508 = vmax.f32 %v500, %v507
        %v509 = vrot.slane %v508, 2
        %v510 = vmax.f32 %v508, %v509
        %v511 = vrot.slane %v510, 1
        %v512 = vmax.f32 %v510, %v511
        %v513 = vrot.slane %v502, 4
        %v514 = vmax.f32 %v502, %v513
        %v515 = vrot.slane %v514, 2
        %v516 = vmax.f32 %v514, %v515
        %v517 = vrot.slane %v516, 1
        %v518 = vmax.f32 %v516, %v517
        %v519 = vrot.slane %v504, 4
        %v520 = vmax.f32 %v504, %v519
        %v521 = vrot.slane %v520, 2
        %v522 = vmax.f32 %v520, %v521
        %v523 = vrot.slane %v522, 1
        %v524 = vmax.f32 %v522, %v523
        %v525 = vrot.slane %v506, 4
        %v526 = vmax.f32 %v506, %v525
        %v527 = vrot.slane %v526, 2
        %v528 = vmax.f32 %v526, %v527
        %v529 = vrot.slane %v528, 1
        %v530 = vmax.f32 %v528, %v529
        %vm531 = vcmp.eq.f32.partialorder %v500, %v512
        %vm532 = vcmp.eq.f32.partialorder %v502, %v518
        %vm533 = vcmp.eq.f32.partialorder %v504, %v524
        %vm534 = vcmp.eq.f32.partialorder %v506, %v530
        %535 = vset.pattern.permute.xlu0 4
        %536 = vperm.xlu0 %535, %v217
        %v537 = vpop.permute.xlu0 %536
        %v538 = vsel %vm531, %v537, 2147483647
        %v539 = vsel %vm532, %v537, 2147483647
        %v540 = vsel %vm533, %v537, 2147483647
        %v541 = vsel %vm534, %v537, 2147483647
        %v542 = vrot.slane %v538, 4
        %vm543 = vcmp.lt.s32.totalorder %v538, %v542
        %v544 = vsel %vm543, %v538, %v542
        %v545 = vrot.slane %v544, 2
        %vm546 = vcmp.lt.s32.totalorder %v544, %v545
        %v547 = vsel %vm546, %v544, %v545
        %v548 = vrot.slane %v547, 1
        %vm549 = vcmp.lt.s32.totalorder %v547, %v548
        %v550 = vsel %vm549, %v547, %v548
        %v551 = vrot.slane %v539, 4
        %vm552 = vcmp.lt.s32.totalorder %v539, %v551
        %v553 = vsel %vm552, %v539, %v551
        %v554 = vrot.slane %v553, 2
        %vm555 = vcmp.lt.s32.totalorder %v553, %v554
        %v556 = vsel %vm555, %v553, %v554
        %v557 = vrot.slane %v556, 1
        %vm558 = vcmp.lt.s32.totalorder %v556, %v557
        %v559 = vsel %vm558, %v556, %v557
        %v560 = vrot.slane %v540, 4
        %vm561 = vcmp.lt.s32.totalorder %v540, %v560
        %v562 = vsel %vm561, %v540, %v560
        %v563 = vrot.slane %v562, 2
        %vm564 = vcmp.lt.s32.totalorder %v562, %v563
        %v565 = vsel %vm564, %v562, %v563
        %v566 = vrot.slane %v565, 1
        %vm567 = vcmp.lt.s32.totalorder %v565, %v566
        %v568 = vsel %vm567, %v565, %v566
        %v569 = vrot.slane %v541, 4
        %vm570 = vcmp.lt.s32.totalorder %v541, %v569
        %v571 = vsel %vm570, %v541, %v569
        %v572 = vrot.slane %v571, 2
        %vm573 = vcmp.lt.s32.totalorder %v571, %v572
        %v574 = vsel %vm573, %v571, %v572
        %v575 = vrot.slane %v574, 1
        %vm576 = vcmp.lt.s32.totalorder %v574, %v575
        %v577 = vsel %vm576, %v574, %v575
        %v578 = vshra.s32 %v550, 16
        %v579 = vshra.s32 %v559, 16
        %v580 = vshra.s32 %v568, 16
        %v581 = vshra.s32 %v577, 16
        %v582 = vand.u32 %v550, 65535
        %v583 = vand.u32 %v559, 65535
        %v584 = vand.u32 %v568, 65535
        %v585 = vand.u32 %v577, 65535
        %vm586 = vcmp.ge.f32.partialorder %v512, 0.5
        %vm587 = vcmp.ge.f32.partialorder %v518, 0.5
        %vm588 = vcmp.ge.f32.partialorder %v524, 0.5
        %vm589 = vcmp.ge.f32.partialorder %v530, 0.5
        %v590 = vsel %vm586, 1, 0
        %v591 = vsel %vm587, 1, 0
        %v592 = vsel %vm588, 1, 0
        %v593 = vsel %vm589, 1, 0
        %vm594 = vcmp.eq.s32.totalorder %v590, 0
        %vm595 = vcmp.eq.s32.totalorder %v591, 0
        %vm596 = vcmp.eq.s32.totalorder %v592, 0
        %vm597 = vcmp.eq.s32.totalorder %v593, 0
        %v598 = vsel %vm594, 20, %v582
        %v599 = vsel %vm595, 20, %v583
        %v600 = vsel %vm596, 20, %v584
        %v601 = vsel %vm597, 20, %v585
        %vm606 = vcmask 1040384
        %v607 = vsel %vm606, %v578, %v512
        %v608 = vsel %vm606, %v579, %v518
        %v609 = vsel %vm606, %v580, %v524
        %v610 = vsel %vm606, %v581, %v530
        %vm611 = vcmask 1041408
        %v612 = vsel %vm611, %v607, %v590
        %v613 = vsel %vm611, %v608, %v591
        %v614 = vsel %vm611, %v609, %v592
        %v615 = vsel %vm611, %v610, %v593
        %vm616 = vcmask 1042432
        %v617 = vsel %vm616, %v612, %v598
        %v618 = vsel %vm616, %v613, %v599
        %v619 = vsel %vm616, %v614, %v600
        %v620 = vsel %vm616, %v615, %v601
        %v621 = vcombine.low %v617, %v618
        %v622 = vcombine.low %v619, %v620
        %623 = vst [vmem:[%s214] sm:$0xff] %v621
        %624 = vst [vmem:[%s214 + $0x8] sm:$0xff] %v622
        %s625 = sand.u32 %s98, 1
        %s626 = scalar_lea.sflag [#allocation4], %s625
        %s627 = sand.u32 %s98, 1
        %s628 = smul.addr %s627, 16
        %s629 = scalar_lea.vmem [#allocation7], %s628
        // Predicated region
        $region37: #{tpu_custom_call.1} parent=27 // pred_check
          %p630 = pneg %p108
        $region38: #{tpu_custom_call.1} parent=27 // pred_check_branch
          %632 = sbr.rel (%p630) target = $region40
        $region39: #{tpu_custom_call.1} parent=27 // pred_region
          %s633 = smul.u32 4, %s27
          %s635 = ssub.s32 256, 256
          %636 = vsyncadd %s626, %s635
          %s637 = smul.addr %s26, 8
          %s638 = sadd.s32 %s633, %s637
          %s639 = smul.addr %s638, 64
          %s640 = scalar_lea.hbm %s2, %s639
          %s642 = sshll.u32 %s629, 4
          %s643 = int_to_ptr.vmem [resolvable:$true] %s642
          %645 = dma.vmem_to_hbm [thread:$0]  %s643, 256, %s640, %s626
        $region40: #{tpu_custom_call.1} parent=27 // pred_fallthru
          _
      $region28: #{tpu_custom_call.1} parent=5 // pred_fallthru
        _
      %p646 = scmp.le.s32.totalorder 2, %s17
      // Predicated region
      $region41: #{tpu_custom_call.1} parent=5 // pred_check
        %p647 = pneg %p646
      $region42: #{tpu_custom_call.1} parent=5 // pred_check_branch
        %649 = sbr.rel (%p647) target = $region44
      $region43: #{tpu_custom_call.1} parent=5 // pred_region
        %s650 = ssub.s32 %s17, 2
        // Predicated region
        $region45: #{tpu_custom_call.1} parent=43 // pred_check
          %p651 = pneg %p114
        $region46: #{tpu_custom_call.1} parent=43 // pred_check_branch
          %653 = sbr.rel (%p651) target = $region48
        $region47: #{tpu_custom_call.1} parent=43 // pred_region
          %s654 = sand.u32 %s99, 1
          %s655 = scalar_lea.sflag [#allocation4], %s654
          %s656 = sand.u32 %s99, 1
          %s657 = smul.addr %s656, 16
          %s658 = scalar_lea.vmem [#allocation7], %s657
          %659 = dma.done %s655, 256
        $region48: #{tpu_custom_call.1} parent=43 // pred_fallthru
          _
      $region44: #{tpu_custom_call.1} parent=5 // pred_fallthru
        _
    $region6: #{tpu_custom_call.1} parent=1 // loop_footer
      %s21 = sadd.s32 1, %s17
    $region7: #{tpu_custom_call.1} parent=1 // loop_footer_branch
      %16 = sbr.rel target = $region3
    $region8: #{tpu_custom_call.1} parent=1 // loop_exit
      _
    %660 = vsyncpa [#allocation3], 1
    %s661 = scalar_lea.sflag [#allocation3], 1
    %662 = vsyncpa %s661, 1
    %663 = vsyncpa [#allocation6], 1
    %s664 = scalar_lea.sflag [#allocation6], 1
    %665 = vsyncpa %s664, 1
    %666 = vsyncpa [#allocation4], 1
    %s667 = scalar_lea.sflag [#allocation4], 1
    %668 = vsyncpa %s667, 1

</llo_original>
